<compile_context>
chip_gen: v5e
topology: v5e:2x2
jax: 0.10.0
libtpu: 0.0.40
codegen_flags: <defaults>
</compile_context>

<pallas_src>
import functools

import jax
import jax.numpy as jnp
from jax.experimental import pallas as pl
from jax.experimental.pallas import tpu as pltpu


def dice_kernel(pred_ref, target_ref, partial_ref, num_acc, den_acc, *,
                channels_per_tile, lane_tile):
    """Grid = (batch_blocks, hw_blocks, channel_steps).

    pred_ref / target_ref : (bb, channels_per_tile * lane_tile) VMEM tiles.
    partial_ref           : (1, 1, 1) per-(i, j)-block fully reduced partial.
    num_acc / den_acc     : (bb, lane_tile) f32 accumulators over the channel
                            grid axis.
    """
    c_step = pl.program_id(2)

    if channels_per_tile == 1:
        # Main path: one channel slice per grid step; tile is fully dense.
        p = pred_ref[...].astype(jnp.float32)
        t = target_ref[...].astype(jnp.float32)
        prod = p * t
        ssum = p + t
    else:
        # Fallback (HW not a multiple of 128): tile holds a whole (C*HW) row;
        # statically unrolled channel reduction on the VPU.
        prod = None
        ssum = None
        for k in range(channels_per_tile):
            p = pred_ref[:, k * lane_tile:(k + 1) * lane_tile].astype(jnp.float32)
            t = target_ref[:, k * lane_tile:(k + 1) * lane_tile].astype(jnp.float32)
            pk = p * t
            sk = p + t
            prod = pk if prod is None else prod + pk
            ssum = sk if ssum is None else ssum + sk

    @pl.when(c_step == 0)
    def _():
        num_acc[...] = prod
        den_acc[...] = ssum

    @pl.when(c_step != 0)
    def _():
        num_acc[...] = num_acc[...] + prod
        den_acc[...] = den_acc[...] + ssum

    @pl.when(c_step == pl.num_programs(2) - 1)
    def _():
        num = num_acc[...] + 1.0
        den = den_acc[...] + 1.0
        ratio = 2.0 * num * pl.reciprocal(den, approx=False)   # exact divide
        row = jnp.sum(ratio, axis=0, keepdims=True)            # sublane reduce -> (1, tw)
        partial_ref[0] = jnp.sum(row, axis=1, keepdims=True)   # lane reduce    -> (1, 1)


def _chip_budgets():
    """(per-input tile byte target, scoped vmem_limit_bytes) for this chip."""
    try:
        vmem_cap = pltpu.get_tpu_info().vmem_capacity_bytes
    except Exception:
        vmem_cap = 64 << 20           # conservative (v7x-sized VMEM)
    if vmem_cap >= (96 << 20):        # v5e / v6e: 128 MiB physical VMEM
        return 4 << 20, 64 << 20
    return 2 << 20, 40 << 20          # v7x: 64 MiB physical VMEM


def _choose_tiles(batch, hw, itemsize, target_tile_bytes):
    """Pick (batch_block, lane_tile) with lane_tile | hw and lane_tile % 128 == 0.

    Preference: >=2 total (i, j) blocks (v7x megacore), fill all 8 sublanes,
    biggest tile under the byte budget, then lane-dense.
    """
    lane_opts = [d for d in range(128, hw + 1, 128) if hw % d == 0]
    batch_opts = [d for d in range(1, batch + 1) if batch % d == 0]
    best_key, best = None, None
    for bb in batch_opts:
        for tw in lane_opts:
            fits = bb * tw * itemsize <= target_tile_bytes
            if not fits and not (bb == 1 and tw == lane_opts[0]):
                continue
            nblocks = (batch // bb) * (hw // tw)
            key = (nblocks >= 2, min(bb, 8), bb * tw, tw)
            if best_key is None or key > best_key:
                best_key, best = key, (bb, tw)
    return best


def dice_coefficient(pred, target, *, target_tile_bytes=None):
    assert pred.shape == target.shape
    B, C, H, W = pred.shape
    HW = H * W
    itemsize = jnp.dtype(pred.dtype).itemsize

    chip_tile_bytes, vmem_limit = _chip_budgets()
    if target_tile_bytes is None:
        target_tile_bytes = chip_tile_bytes

    # Lane-dense 2-D view; row-major reshape is free (no HBM copy, no dtype cast).
    p = pred.reshape(B, C * HW)
    t = target.reshape(B, C * HW)

    if HW % 128 == 0:
        bb, tw = _choose_tiles(B, HW, itemsize, target_tile_bytes)
        cpt = 1                       # channels per tile
        nj = HW // tw                 # spatial blocks
        n_csteps = C                  # channel reduction on the grid
    else:
        # Fallback: whole (C*HW) row per tile, channel reduction in the body.
        tw, cpt, nj, n_csteps = HW, C, 1, 1
        row_bytes = C * HW * itemsize
        bb = max((d for d in range(1, B + 1)
                  if B % d == 0 and d * row_bytes <= target_tile_bytes), default=1)
    nb = B // bb
    block_cols = cpt * tw

    kernel = functools.partial(dice_kernel, channels_per_tile=cpt, lane_tile=tw)

    cost = pl.CostEstimate(
        flops=3 * B * C * HW + 6 * B * HW,
        transcendentals=0,
        bytes_accessed=2 * B * C * HW * itemsize + nb * nj * 4,
    )

    partials = pl.pallas_call(
        kernel,
        out_shape=jax.ShapeDtypeStruct((nb * nj, 1, 1), jnp.float32),
        grid_spec=pltpu.PrefetchScalarGridSpec(
            num_scalar_prefetch=0,
            grid=(nb, nj, n_csteps),
            in_specs=[
                pl.BlockSpec((bb, block_cols), lambda i, j, c: (i, c * nj + j)),
                pl.BlockSpec((bb, block_cols), lambda i, j, c: (i, c * nj + j)),
            ],
            out_specs=pl.BlockSpec((1, 1, 1), lambda i, j, c: (i * nj + j, 0, 0)),
            scratch_shapes=[
                pltpu.VMEM((bb, tw), jnp.float32),   # num accumulator
                pltpu.VMEM((bb, tw), jnp.float32),   # den accumulator
            ],
        ),
        compiler_params=pltpu.CompilerParams(
            dimension_semantics=("parallel", "parallel", "arbitrary"),
            vmem_limit_bytes=vmem_limit,
        ),
        cost_estimate=cost,
    )(p, t)

    # Tiny final reduction + mean in the wrapper (per-block partials are
    # independent -> no sequential cross-block accumulator in the kernel).
    return jnp.sum(partials) / (B * HW)


def dice_coefficient_ref(pred, target):
    num = jnp.sum(pred * target, axis=1) + 1.0
    den = jnp.sum(pred + target, axis=1) + 1.0
    return jnp.mean(2.0 * num / den)


if __name__ == "__main__":
    key = jax.random.PRNGKey(0)
    k1, k2 = jax.random.split(key)
    # Small segmentation-style (B, C, H, W) inputs.
    pred = jax.random.uniform(k1, (2, 4, 16, 16), dtype=jnp.float32)
    target = (jax.random.uniform(k2, (2, 4, 16, 16)) > 0.5).astype(jnp.float32)

    out = dice_coefficient(pred, target)
    out = jax.block_until_ready(out)

    ref = dice_coefficient_ref(pred, target)
    assert jnp.allclose(out, ref, rtol=1e-5, atol=1e-6), (out, ref)

    print("KERNEL_OK")
</pallas_src>

<mosaic_0001>
module attributes {stable_mosaic.version = 11 : i64} {
  func.func @dice_kernel(%arg0: i32, %arg1: i32, %arg2: i32, %arg3: memref<2x128xf32, #tpu.memory_space<vmem>>, %arg4: memref<2x128xf32, #tpu.memory_space<vmem>>, %arg5: memref<1x1x1xf32, #tpu.memory_space<vmem>>, %arg6: memref<2x128xf32, #tpu.memory_space<vmem>>, %arg7: memref<2x128xf32, #tpu.memory_space<vmem>>) attributes {dimension_semantics = [#tpu.dimension_semantics<parallel>, #tpu.dimension_semantics<parallel>, #tpu.dimension_semantics<arbitrary>], iteration_bounds = array<i64: 1, 2, 4>, scalar_prefetch = 0 : i64, scratch_operands = 2 : i64, tpu.core_type = #tpu.core_type<tc>, window_params = [{transform_indices = @transform_0, window_bounds = array<i64: 2, 128>}, {transform_indices = @transform_1, window_bounds = array<i64: 2, 128>}, {transform_indices = @transform_2, window_bounds = array<i64: 1, 1, 1>}]} {
    %c0 = arith.constant 0 : index
    %c0_0 = arith.constant 0 : index
    %0 = vector.load %arg3[%c0, %c0_0] : memref<2x128xf32, #tpu.memory_space<vmem>>, vector<2x128xf32>
    %c0_1 = arith.constant 0 : index
    %c0_2 = arith.constant 0 : index
    %1 = vector.load %arg4[%c0_1, %c0_2] : memref<2x128xf32, #tpu.memory_space<vmem>>, vector<2x128xf32>
    %2 = arith.mulf %0, %1 : vector<2x128xf32>
    %3 = arith.addf %0, %1 : vector<2x128xf32>
    %c0_i32 = arith.constant 0 : i32
    %4 = arith.cmpi eq, %arg2, %c0_i32 : i32
    %5 = arith.extui %4 : i1 to i32
    %c0_i32_3 = arith.constant 0 : i32
    %6 = arith.cmpi ne, %5, %c0_i32_3 : i32
    scf.if %6 {
      %c0_7 = arith.constant 0 : index
      %c0_8 = arith.constant 0 : index
      %13 = vector.load %arg6[%c0_7, %c0_8] : memref<2x128xf32, #tpu.memory_space<vmem>>, vector<2x128xf32>
      tpu.vector_store %arg6[%c0_7, %c0_8], %2 {strides = array<i32>} : memref<2x128xf32, #tpu.memory_space<vmem>>, vector<2x128xf32>,
      %c0_9 = arith.constant 0 : index
      %c0_10 = arith.constant 0 : index
      %14 = vector.load %arg7[%c0_9, %c0_10] : memref<2x128xf32, #tpu.memory_space<vmem>>, vector<2x128xf32>
      tpu.vector_store %arg7[%c0_9, %c0_10], %3 {strides = array<i32>} : memref<2x128xf32, #tpu.memory_space<vmem>>, vector<2x128xf32>,
    } else {
    }
    %c0_i32_4 = arith.constant 0 : i32
    %7 = arith.cmpi ne, %arg2, %c0_i32_4 : i32
    %8 = arith.extui %7 : i1 to i32
    %c0_i32_5 = arith.constant 0 : i32
    %9 = arith.cmpi ne, %8, %c0_i32_5 : i32
    scf.if %9 {
      %c0_7 = arith.constant 0 : index
      %c0_8 = arith.constant 0 : index
      %13 = vector.load %arg6[%c0_7, %c0_8] : memref<2x128xf32, #tpu.memory_space<vmem>>, vector<2x128xf32>
      %14 = arith.addf %13, %2 : vector<2x128xf32>
      %c0_9 = arith.constant 0 : index
      %c0_10 = arith.constant 0 : index
      %15 = vector.load %arg6[%c0_9, %c0_10] : memref<2x128xf32, #tpu.memory_space<vmem>>, vector<2x128xf32>
      tpu.vector_store %arg6[%c0_9, %c0_10], %14 {strides = array<i32>} : memref<2x128xf32, #tpu.memory_space<vmem>>, vector<2x128xf32>,
      %c0_11 = arith.constant 0 : index
      %c0_12 = arith.constant 0 : index
      %16 = vector.load %arg7[%c0_11, %c0_12] : memref<2x128xf32, #tpu.memory_space<vmem>>, vector<2x128xf32>
      %17 = arith.addf %16, %3 : vector<2x128xf32>
      %c0_13 = arith.constant 0 : index
      %c0_14 = arith.constant 0 : index
      %18 = vector.load %arg7[%c0_13, %c0_14] : memref<2x128xf32, #tpu.memory_space<vmem>>, vector<2x128xf32>
      tpu.vector_store %arg7[%c0_13, %c0_14], %17 {strides = array<i32>} : memref<2x128xf32, #tpu.memory_space<vmem>>, vector<2x128xf32>,
    } else {
    }
    %c3_i32 = arith.constant 3 : i32
    %10 = arith.cmpi eq, %arg2, %c3_i32 : i32
    %11 = arith.extui %10 : i1 to i32
    %c0_i32_6 = arith.constant 0 : i32
    %12 = arith.cmpi ne, %11, %c0_i32_6 : i32
    scf.if %12 {
      %c0_7 = arith.constant 0 : index
      %c0_8 = arith.constant 0 : index
      %13 = vector.load %arg6[%c0_7, %c0_8] : memref<2x128xf32, #tpu.memory_space<vmem>>, vector<2x128xf32>
      %cst = arith.constant 1.000000e+00 : f32
      %14 = vector.broadcast %cst : f32 to vector<2x128xf32>
      %15 = arith.addf %13, %14 : vector<2x128xf32>
      %c0_9 = arith.constant 0 : index
      %c0_10 = arith.constant 0 : index
      %16 = vector.load %arg7[%c0_9, %c0_10] : memref<2x128xf32, #tpu.memory_space<vmem>>, vector<2x128xf32>
      %cst_11 = arith.constant 1.000000e+00 : f32
      %17 = vector.broadcast %cst_11 : f32 to vector<2x128xf32>
      %18 = arith.addf %16, %17 : vector<2x128xf32>
      %cst_12 = arith.constant 2.000000e+00 : f32
      %19 = vector.broadcast %cst_12 : f32 to vector<2x128xf32>
      %20 = arith.mulf %19, %15 : vector<2x128xf32>
      %21 = tpu.reciprocal %18 : vector<2x128xf32> -> vector<2x128xf32>
      %22 = arith.mulf %20, %21 : vector<2x128xf32>
      %cst_13 = arith.constant dense<0.000000e+00> : vector<128xf32>
      %23 = vector.multi_reduction <add>, %22, %cst_13 [0] : vector<2x128xf32> to vector<128xf32>
      %24 = vector.shape_cast %23 : vector<128xf32> to vector<1x128xf32>
      %cst_14 = arith.constant dense<0.000000e+00> : vector<1xf32>
      %25 = vector.multi_reduction <add>, %24, %cst_14 [1] : vector<1x128xf32> to vector<1xf32>
      %26 = vector.shape_cast %25 : vector<1xf32> to vector<1x1xf32>
      %c0_15 = arith.constant 0 : index
      %c0_16 = arith.constant 0 : index
      %c0_17 = arith.constant 0 : index
      %27 = vector.load %arg5[%c0_15, %c0_16, %c0_17] : memref<1x1x1xf32, #tpu.memory_space<vmem>>, vector<1x1x1xf32>
      %28 = vector.shape_cast %27 : vector<1x1x1xf32> to vector<1x1xf32>
      %29 = vector.shape_cast %26 : vector<1x1xf32> to vector<1x1x1xf32>
      tpu.vector_store %arg5[%c0_15, %c0_16, %c0_17], %29 {strides = array<i32>} : memref<1x1x1xf32, #tpu.memory_space<vmem>>, vector<1x1x1xf32>,
    } else {
    }
    return
  }
  func.func @transform_0(%arg0: i32, %arg1: i32, %arg2: i32) -> (i32, i32) {
    %c2_i32 = arith.constant 2 : i32
    %0 = arith.muli %arg2, %c2_i32 : i32
    %1 = arith.addi %0, %arg1 : i32
    %c0_i32 = arith.constant 0 : i32
    return %arg0, %1 : i32, i32
  }
  func.func @transform_1(%arg0: i32, %arg1: i32, %arg2: i32) -> (i32, i32) {
    %c2_i32 = arith.constant 2 : i32
    %0 = arith.muli %arg2, %c2_i32 : i32
    %1 = arith.addi %0, %arg1 : i32
    %c0_i32 = arith.constant 0 : i32
    return %arg0, %1 : i32, i32
  }
  func.func @transform_2(%arg0: i32, %arg1: i32, %arg2: i32) -> (i32, i32, i32) {
    %c2_i32 = arith.constant 2 : i32
    %0 = arith.muli %arg0, %c2_i32 : i32
    %1 = arith.addi %0, %arg1 : i32
    %c0_i32 = arith.constant 0 : i32
    %c0_i32_0 = arith.constant 0 : i32
    %c0_i32_1 = arith.constant 0 : i32
    return %1, %c0_i32, %c0_i32_0 : i32, i32, i32
  }
}

</mosaic_0001>

<llo_original>
// kernel: tpu_custom_call.1
$region0: #{tpu_custom_call.1}
  #allocation0 [shape = 'u32[]', space=smem, size = 0x4, offset = 0x4, fixed_abs, tag = 'smem constant byte address 0x4 - core index']
  #allocation1 [shape = 'u32[72,128]{1,0:T(1,128)}', space=vmem, size = 0x9000, scoped, tag = 'internal scratch']
  #allocation2 [shape = 'f32[2,128]{1,0:T(2,128)}', space=vmem, size = 0x400, scoped, tag = 'scratch operand']
  #allocation3 [shape = 'f32[2,128]{1,0:T(2,128)}', space=vmem, size = 0x400, scoped, tag = 'scratch operand']
  %s0 = inlined_call_operand.hbm [shape: f32[2,1024], index: 0, kind: input, shape index: {}]
  %s1 = inlined_call_operand.hbm [shape: f32[2,1024], index: 1, kind: input, shape index: {}]
  %s2 = inlined_call_operand.vmem [shape: f32[2,1,1], index: 2, kind: output, shape index: {}]
  %s3 = sld [smem:[#allocation0]]
  $region61: #{tpu_custom_call.1} parent=0
    _
  %s5 = ssub.s32 1, %s3
  %s6 = scalar_select 0, %s5, %s3
  $region1: #{tpu_custom_call.1} parent=0
    #allocation4 [shape = 'u8[2048]{0}', space=vmem, size = 0x800, scoped, tag = 'input window, operand 0']
    #allocation5 [shape = 's32[2]{0}', space=sflag, size = 0x8, scoped, tag = 'scoped memory for tpu_custom_call.1']
    #allocation6 [shape = 'u8[2048]{0}', space=vmem, size = 0x800, scoped, tag = 'input window, operand 1']
    #allocation7 [shape = 's32[2]{0}', space=sflag, size = 0x8, scoped, tag = 'scoped memory for tpu_custom_call.1']
    %7 = vsyncpa [#allocation5], 0
    %s8 = scalar_lea.sflag [#allocation5], 1
    %9 = vsyncpa %s8, 0
    %10 = vsyncpa [#allocation7], 0
    %s11 = scalar_lea.sflag [#allocation7], 1
    %12 = vsyncpa %s11, 0
    loop: start=0, step=1, limit=10
    $region2: #{tpu_custom_call.1} parent=1 // loop_pre_header
      _
    $region3: #{tpu_custom_call.1} parent=1 // loop_header
      %s14 = sphi 0, %s18
      %p15 = scmp.ge.s32.totalorder %s14, 10
      %s21 = sphi 0, %s40
      %s22 = sphi 0, %s36
      %s23 = sphi 0, %s32
      %s24 = sphi 0, %s21
      %s25 = sphi 0, %s22
      %s26 = sphi 0, %s23
      %s27 = sphi 0, %s24
      %s28 = sphi 0, %s25
      %s29 = sphi 0, %s26
      %s49 = sphi 0, %s51
      %s52 = sphi 0, %s49
      %s53 = sphi 0, %s52
      %s69 = sphi 0, %s53
      %s81 = sphi 0, %s83
      %s84 = sphi 0, %s81
      %s85 = sphi 0, %s84
      %s101 = sphi 0, %s85
      %s111 = sphi 0, %s113
      %s114 = sphi 0, %s111
      %s115 = sphi 0, %s114
      %s131 = sphi 0, %s115
    $region4: #{tpu_custom_call.1} parent=1 // loop_header_branch
      %17 = sbr.rel (%p15) target = $region8
    $region5: #{tpu_custom_call.1} parent=1 // loop_body
      %s19 = ssub.s32 %s14, 1
      %s20 = ssub.s32 %s14, 2
      %s30 = sadd.s32 1, %s23
      %p31 = scmp.ge.s32.totalorder %s30, 4
      %s32 = scalar_select %p31, 0, %s30
      %s33 = sadd.s32 1, %s22
      %s34 = scalar_select %p31, %s33, %s22
      %p35 = scmp.ge.s32.totalorder %s34, 2
      %s36 = scalar_select %p35, 0, %s34
      %s37 = sadd.s32 1, %s21
      %s38 = scalar_select %p35, %s37, %s21
      %p39 = scmp.ge.s32.totalorder %s38, 1
      %s40 = scalar_select %p39, 0, %s38
      %s41 = smul.u32 %s23, 2
      %s42 = sadd.s32 %s41, %s22
      %s43 = smul.u32 %s32, 2
      %s44 = sadd.s32 %s43, %s36
      %s45 = ssub.s32 %s21, %s40
      %s46 = ssub.s32 %s42, %s44
      %s47 = sor.u32 %s45, %s46
      %p48 = scmp.eq.s32.totalorder %s47, 0
      %s50 = sadd.s32 %s49, 1
      %s51 = scalar_select %p48, %s49, %s50
      %p54 = pneg %p48
      %p55 = scmp.eq.s32.totalorder %s14, 7
      %p56 = por %p54, %p55
      %p57 = scmp.ne.s32.totalorder %s49, %s52
      %p58 = scmp.eq.s32.totalorder %s14, 0
      %p59 = por %p57, %p58
      %p60 = scmp.ne.s32.totalorder %s49, %s52
      %p61 = scmp.eq.s32.totalorder %s19, 7
      %p62 = por %p60, %p61
      %p63 = scmp.ne.s32.totalorder %s52, %s53
      %p64 = scmp.eq.s32.totalorder %s19, 0
      %p65 = por %p63, %p64
      %p66 = scmp.ne.s32.totalorder %s52, %s53
      %p67 = scmp.eq.s32.totalorder %s20, 7
      %p68 = por %p66, %p67
      %p70 = scmp.ne.s32.totalorder %s53, %s69
      %p71 = scmp.eq.s32.totalorder %s20, 0
      %p72 = por %p70, %p71
      %s73 = smul.u32 %s23, 2
      %s74 = sadd.s32 %s73, %s22
      %s75 = smul.u32 %s32, 2
      %s76 = sadd.s32 %s75, %s36
      %s77 = ssub.s32 %s21, %s40
      %s78 = ssub.s32 %s74, %s76
      %s79 = sor.u32 %s77, %s78
      %p80 = scmp.eq.s32.totalorder %s79, 0
      %s82 = sadd.s32 %s81, 1
      %s83 = scalar_select %p80, %s81, %s82
      %p86 = pneg %p80
      %p87 = scmp.eq.s32.totalorder %s14, 7
      %p88 = por %p86, %p87
      %p89 = scmp.ne.s32.totalorder %s81, %s84
      %p90 = scmp.eq.s32.totalorder %s14, 0
      %p91 = por %p89, %p90
      %p92 = scmp.ne.s32.totalorder %s81, %s84
      %p93 = scmp.eq.s32.totalorder %s19, 7
      %p94 = por %p92, %p93
      %p95 = scmp.ne.s32.totalorder %s84, %s85
      %p96 = scmp.eq.s32.totalorder %s19, 0
      %p97 = por %p95, %p96
      %p98 = scmp.ne.s32.totalorder %s84, %s85
      %p99 = scmp.eq.s32.totalorder %s20, 7
      %p100 = por %p98, %p99
      %p102 = scmp.ne.s32.totalorder %s85, %s101
      %p103 = scmp.eq.s32.totalorder %s20, 0
      %p104 = por %p102, %p103
      %s105 = smul.u32 %s21, 2
      %s106 = sadd.s32 %s105, %s22
      %s107 = smul.u32 %s40, 2
      %s108 = sadd.s32 %s107, %s36
      %s109 = ssub.s32 %s106, %s108
      %p110 = scmp.eq.s32.totalorder %s109, 0
      %s112 = sadd.s32 %s111, 1
      %s113 = scalar_select %p110, %s111, %s112
      %p116 = pneg %p110
      %p117 = scmp.eq.s32.totalorder %s14, 7
      %p118 = por %p116, %p117
      %p119 = scmp.ne.s32.totalorder %s111, %s114
      %p120 = scmp.eq.s32.totalorder %s14, 0
      %p121 = por %p119, %p120
      %p122 = scmp.ne.s32.totalorder %s111, %s114
      %p123 = scmp.eq.s32.totalorder %s19, 7
      %p124 = por %p122, %p123
      %p125 = scmp.ne.s32.totalorder %s114, %s115
      %p126 = scmp.eq.s32.totalorder %s19, 0
      %p127 = por %p125, %p126
      %p128 = scmp.ne.s32.totalorder %s114, %s115
      %p129 = scmp.eq.s32.totalorder %s20, 7
      %p130 = por %p128, %p129
      %p132 = scmp.ne.s32.totalorder %s115, %s131
      %p133 = scmp.eq.s32.totalorder %s20, 0
      %p134 = por %p132, %p133
      %p135 = scmp.le.s32.totalorder 1, %s14
      %p136 = scmp.lt.s32.totalorder %s14, 9
      %p137 = pnand %p135, %p136
      %p138 = pneg %p137
      // Predicated region
      $region9: #{tpu_custom_call.1} parent=5 // pred_check
        _
      $region10: #{tpu_custom_call.1} parent=5 // pred_check_branch
        %140 = sbr.rel (%p137) target = $region12
      $region11: #{tpu_custom_call.1} parent=5 // pred_region
        %s141 = ssub.s32 %s14, 1
      $region12: #{tpu_custom_call.1} parent=5 // pred_fallthru
        _
      %p142 = scmp.lt.s32.totalorder %s14, 8
      // Predicated region
      $region13: #{tpu_custom_call.1} parent=5 // pred_check
        %p143 = pneg %p142
      $region14: #{tpu_custom_call.1} parent=5 // pred_check_branch
        %145 = sbr.rel (%p143) target = $region16
      $region15: #{tpu_custom_call.1} parent=5 // pred_region
        // Predicated region
        $region17: #{tpu_custom_call.1} parent=15 // pred_check
          %p146 = pneg %p59
        $region18: #{tpu_custom_call.1} parent=15 // pred_check_branch
          %148 = sbr.rel (%p146) target = $region20
        $region19: #{tpu_custom_call.1} parent=15 // pred_region
          %s149 = sand.u32 %s49, 1
          %s150 = scalar_lea.sflag [#allocation5], %s149
          %s151 = sand.u32 %s49, 1
          %s152 = smul.addr %s151, 2
          %s153 = scalar_lea.vmem [#allocation4], %s152
          %s154 = smul.u32 %s23, 2
          %s155 = sadd.s32 %s154, %s22
          %157 = vsyncadd %s150, 0
          %s158 = smul.addr %s21, 8
          %s159 = sadd.s32 %s155, %s158
          %s160 = smul.addr %s159, 2
          %s161 = scalar_lea.hbm %s0, %s160
          %s163 = sshll.u32 %s161, 4
          %s164 = int_to_ptr.hbm [resolvable:$true] %s163
          %s165 = sshll.u32 %s153, 4
          %s166 = int_to_ptr.vmem [resolvable:$true] %s165
          %168 = dma.hbm_to_vmem [thread:$0]  %s164, 32, %s166, %s150
        $region20: #{tpu_custom_call.1} parent=15 // pred_fallthru
          _
        // Predicated region
        $region21: #{tpu_custom_call.1} parent=15 // pred_check
          %p169 = pneg %p91
        $region22: #{tpu_custom_call.1} parent=15 // pred_check_branch
          %171 = sbr.rel (%p169) target = $region24
        $region23: #{tpu_custom_call.1} parent=15 // pred_region
          %s172 = sand.u32 %s81, 1
          %s173 = scalar_lea.sflag [#allocation7], %s172
          %s174 = sand.u32 %s81, 1
          %s175 = smul.addr %s174, 2
          %s176 = scalar_lea.vmem [#allocation6], %s175
          %s177 = smul.u32 %s23, 2
          %s178 = sadd.s32 %s177, %s22
          %180 = vsyncadd %s173, 0
          %s181 = smul.addr %s21, 8
          %s182 = sadd.s32 %s178, %s181
          %s183 = smul.addr %s182, 2
          %s184 = scalar_lea.hbm %s1, %s183
          %s186 = sshll.u32 %s184, 4
          %s187 = int_to_ptr.hbm [resolvable:$true] %s186
          %s188 = sshll.u32 %s176, 4
          %s189 = int_to_ptr.vmem [resolvable:$true] %s188
          %191 = dma.hbm_to_vmem [thread:$0]  %s187, 32, %s189, %s173
        $region24: #{tpu_custom_call.1} parent=15 // pred_fallthru
          _
      $region16: #{tpu_custom_call.1} parent=5 // pred_fallthru
        _
      %p192 = scmp.le.s32.totalorder 1, %s14
      %p193 = scmp.lt.s32.totalorder %s14, 9
      %p194 = pnand %p192, %p193
      %p195 = pneg %p194
      // Predicated region
      $region25: #{tpu_custom_call.1} parent=5 // pred_check
        _
      $region26: #{tpu_custom_call.1} parent=5 // pred_check_branch
        %197 = sbr.rel (%p194) target = $region28
      $region27: #{tpu_custom_call.1} parent=5 // pred_region
        %s198 = ssub.s32 %s14, 1
        %s199 = sand.u32 %s52, 1
        %s200 = scalar_lea.sflag [#allocation5], %s199
        %s201 = sand.u32 %s52, 1
        %s202 = smul.addr %s201, 2
        %s203 = scalar_lea.vmem [#allocation4], %s202
        // Predicated region
        $region29: #{tpu_custom_call.1} parent=27 // pred_check
          %p204 = pneg %p65
        $region30: #{tpu_custom_call.1} parent=27 // pred_check_branch
          %206 = sbr.rel (%p204) target = $region32
        $region31: #{tpu_custom_call.1} parent=27 // pred_region
          %208 = dma.done %s200, 32
        $region32: #{tpu_custom_call.1} parent=27 // pred_fallthru
          _
        %s209 = sand.u32 %s84, 1
        %s210 = scalar_lea.sflag [#allocation7], %s209
        %s211 = sand.u32 %s84, 1
        %s212 = smul.addr %s211, 2
        %s213 = scalar_lea.vmem [#allocation6], %s212
        // Predicated region
        $region33: #{tpu_custom_call.1} parent=27 // pred_check
          %p214 = pneg %p97
        $region34: #{tpu_custom_call.1} parent=27 // pred_check_branch
          %216 = sbr.rel (%p214) target = $region36
        $region35: #{tpu_custom_call.1} parent=27 // pred_region
          %218 = dma.done %s210, 32
        $region36: #{tpu_custom_call.1} parent=27 // pred_fallthru
          _
        %s219 = sand.u32 %s52, 1
        %s220 = scalar_lea.sflag [#allocation5], %s219
        %s221 = sand.u32 %s52, 1
        %s222 = smul.addr %s221, 2
        %s223 = scalar_lea.vmem [#allocation4], %s222
        %p224 = pneg %p65
        %p225 = pneg %p62
        %s226 = sand.u32 %s84, 1
        %s227 = scalar_lea.sflag [#allocation7], %s226
        %s228 = sand.u32 %s84, 1
        %s229 = smul.addr %s228, 2
        %s230 = scalar_lea.vmem [#allocation6], %s229
        %p231 = pneg %p97
        %p232 = pneg %p94
        %p233 = pneg %p127
        %p234 = pneg %p124
        %s235 = smul.u32 %s24, 2
        %s236 = sadd.s32 %s235, %s25
        %p237 = scmp.lt.s32.totalorder %s236, 1
        %s238 = scalar_select %p237, %s236, 1
        %s239 = scalar_lea.vmem %s2, %s238
        %s240 = smul.u32 %s26, 2
        %s241 = sadd.s32 %s240, %s25
        %s242 = smul.u32 %s26, 2
        %s243 = sadd.s32 %s242, %s25
        %s244 = smul.u32 %s24, 2
        %s245 = sadd.s32 %s244, %s25
        %p246 = scmp.lt.s32.totalorder %s245, 1
        %s247 = scalar_select %p246, %s245, 1
        %s248 = scalar_lea.vmem %s2, %s247
        %s249 = smul.u32 %s24, 2
        %s250 = sadd.s32 %s249, %s25
        %v251 = vld [vmem:[%s203] sm:$0x3]
        %v252 = vld [vmem:[%s213] sm:$0x3]
        %v253 = vmul.f32 %v251, %v252
        %v254 = vadd.f32 %v251, %v252
        %p255 = scmp.eq.s32.totalorder %s26, 0
        // Predicated region
        $region37: #{tpu_custom_call.1} parent=27 // pred_check
          %p256 = pneg %p255
        $region38: #{tpu_custom_call.1} parent=27 // pred_check_branch
          %258 = sbr.rel (%p256) target = $region40
        $region39: #{tpu_custom_call.1} parent=27 // pred_region
          %259 = vst [vmem:[#allocation2] sm:$0x3] %v253
          %260 = vst [vmem:[#allocation3] sm:$0x3] %v254
        $region40: #{tpu_custom_call.1} parent=27 // pred_fallthru
          _
        %p261 = scmp.ne.s32.totalorder %s26, 0
        // Predicated region
        $region41: #{tpu_custom_call.1} parent=27 // pred_check
          %p262 = pneg %p261
        $region42: #{tpu_custom_call.1} parent=27 // pred_check_branch
          %264 = sbr.rel (%p262) target = $region44
        $region43: #{tpu_custom_call.1} parent=27 // pred_region
          %v265 = vld [vmem:[#allocation2] sm:$0x3]
          %v266 = vadd.f32 %v265, %v253
          %267 = vst [vmem:[#allocation2] sm:$0x3] %v266
          %v268 = vld [vmem:[#allocation3] sm:$0x3]
          %v269 = vadd.f32 %v268, %v254
          %270 = vst [vmem:[#allocation3] sm:$0x3] %v269
        $region44: #{tpu_custom_call.1} parent=27 // pred_fallthru
          _
        %p271 = scmp.eq.s32.totalorder %s26, 3
        // Predicated region
        $region45: #{tpu_custom_call.1} parent=27 // pred_check
          %p272 = pneg %p271
        $region46: #{tpu_custom_call.1} parent=27 // pred_check_branch
          %274 = sbr.rel (%p272) target = $region48
        $region47: #{tpu_custom_call.1} parent=27 // pred_region
          %v275 = vld [vmem:[#allocation2] sm:$0x3]
          %v276 = vadd.f32 %v275, 1.0
          %v277 = vld [vmem:[#allocation3] sm:$0x3]
          %v278 = vadd.f32 %v277, 1.0
          %v279 = vmul.f32 %v276, 2.0
          %v280 = vrcp.pop %v278
          %v281 = vmul.f32 %v278, %v280
          %v282 = vsub.f32 1.0, %v281
          %v283 = vmul.f32 %v280, %v282
          %v284 = vadd.f32 %v280, %v283
          %vm285 = vweird.f32 %v278
          %vm286 = vweird.f32 %v280
          %vm287 = vmor %vm285, %vm286
          %v288 = vsel %vm287, %v280, %v284
          %v289 = vand.u32 2147483647, %v278
          %vm290 = vcmp.eq.f32.partialorder %v289, 8.507059e+37
          %v291 = vand.u32 %v278, 2147483648
          %v292 = vor.u32 1.1754944e-38, %v291
          %v293 = vsel %vm290, %v292, %v288
          %v294 = vmul.f32 %v279, %v293
          %vm295 = vcmask 1041408
          %v296 = vsel %vm295, %v294, 0.0
          %v297 = vrot.slane %v296, 4
          %v298 = vadd.f32 %v296, %v297
          %v299 = vrot.slane %v298, 2
          %v300 = vadd.f32 %v298, %v299
          %v301 = vrot.slane %v300, 1
          %v302 = vadd.f32 %v300, %v301
          %303 = vadd.xlane.f32.xlu0 %v302
          %v304 = vpop.xlane.xlu0 %303
          %vm305 = vcmask 0
          %306 = vst.msk [vmem:[%s248] sm:$0x1] %vm305, %v304
        $region48: #{tpu_custom_call.1} parent=27 // pred_fallthru
          _
        %s307 = smul.u32 %s24, 2
        %s308 = sadd.s32 %s307, %s25
        %p309 = scmp.lt.s32.totalorder %s308, 1
        %s310 = scalar_select %p309, %s308, 1
        %s311 = scalar_lea.vmem %s2, %s310
        // Predicated region
        $region49: #{tpu_custom_call.1} parent=27 // pred_check
          %p312 = pneg %p124
        $region50: #{tpu_custom_call.1} parent=27 // pred_check_branch
          %314 = sbr.rel (%p312) target = $region52
        $region51: #{tpu_custom_call.1} parent=27 // pred_region
          %s315 = smul.u32 %s24, 2
          %s316 = sadd.s32 %s315, %s25
        $region52: #{tpu_custom_call.1} parent=27 // pred_fallthru
          _
      $region28: #{tpu_custom_call.1} parent=5 // pred_fallthru
        _
      %p317 = scmp.le.s32.totalorder 2, %s14
      // Predicated region
      $region53: #{tpu_custom_call.1} parent=5 // pred_check
        %p318 = pneg %p317
      $region54: #{tpu_custom_call.1} parent=5 // pred_check_branch
        %320 = sbr.rel (%p318) target = $region56
      $region55: #{tpu_custom_call.1} parent=5 // pred_region
        %s321 = ssub.s32 %s14, 2
        // Predicated region
        $region57: #{tpu_custom_call.1} parent=55 // pred_check
          %p322 = pneg %p130
        $region58: #{tpu_custom_call.1} parent=55 // pred_check_branch
          %324 = sbr.rel (%p322) target = $region60
        $region59: #{tpu_custom_call.1} parent=55 // pred_region
          %s325 = smul.u32 %s27, 2
          %s326 = sadd.s32 %s325, %s28
          %p327 = scmp.lt.s32.totalorder %s326, 1
          %s328 = scalar_select %p327, %s326, 1
          %s329 = scalar_lea.vmem %s2, %s328
        $region60: #{tpu_custom_call.1} parent=55 // pred_fallthru
          _
      $region56: #{tpu_custom_call.1} parent=5 // pred_fallthru
        _
    $region6: #{tpu_custom_call.1} parent=1 // loop_footer
      %s18 = sadd.s32 1, %s14
    $region7: #{tpu_custom_call.1} parent=1 // loop_footer_branch
      %13 = sbr.rel target = $region3
    $region8: #{tpu_custom_call.1} parent=1 // loop_exit
      _
    %330 = vsyncpa [#allocation5], 1
    %s331 = scalar_lea.sflag [#allocation5], 1
    %332 = vsyncpa %s331, 1
    %333 = vsyncpa [#allocation7], 1
    %s334 = scalar_lea.sflag [#allocation7], 1
    %335 = vsyncpa %s334, 1

</llo_original>
